<compile_context>
chip_gen: v7x
topology: tpu7x:2x2x1
jax: 0.10.0
libtpu: 0.0.40
codegen_flags: <defaults>
</compile_context>

<pallas_src>
import math

import jax
import jax.numpy as jnp
from jax import lax
from jax.experimental import pallas as pl
from jax.experimental.pallas import tpu as pltpu

EPS = 1e-5  # torch.nn.LayerNorm default eps


# ----------------------------------------------------------------------------- kernel
def _make_kernel(apply_lnh_b: bool, matmul_dtype):
    def kernel(*refs):
        if apply_lnh_b:
            (x_ref, hx0_ref, wh_ref, lnh_w_ref, lnh_b_ref,
             wx_ref, lnx_w_ref, lnx_b_ref, out_ref, h_scr) = refs
        else:
            (x_ref, hx0_ref, wh_ref, lnh_w_ref,
             wx_ref, lnx_w_ref, lnx_b_ref, out_ref, h_scr) = refs
            lnh_b_ref = None

        tblk = pl.program_id(1)
        Tt = x_ref.shape[0]          # timesteps handled by this grid step
        N = x_ref.shape[-1]

        # Weights / LN params are VMEM-resident for the whole call (constant
        # index maps, single-buffered); hoist the loads out of the time loop.
        wh = wh_ref[...]             # [N, 2N] matmul_dtype
        wx = wx_ref[...]             # [N, N]  matmul_dtype
        lnh_w = lnh_w_ref[...]       # [1, 2N] f32
        lnx_w = lnx_w_ref[...]       # [1, N]  f32
        lnx_b = lnx_b_ref[...]       # [1, N]  f32
        lnh_b = lnh_b_ref[...] if apply_lnh_b else None

        # Initialize the carried hidden state from hx0 at the first time-block
        # of this batch tile.
        @pl.when(tblk == 0)
        def _():
            h_scr[...] = hx0_ref[...].astype(jnp.float32)

        inv_kh = 1.0 / (2 * N)
        inv_kx = 1.0 / N

        h0 = h_scr[...]
        carry0 = (h0, h0.astype(matmul_dtype))   # (f32 state, pre-cast MXU operand)

        def step(tt, carry):
            hx, hx_mm = carry
            x = x_ref[tt].astype(jnp.float32)    # [TB, N]

            # ---- h2h: Linear(N -> 2N, bias=False) + LayerNorm(2N) ----
            # One-pass stats: sum and sum-of-squares are independent reductions
            # (overlap on the XLU); max(.,0) clamp prevents negative variance.
            hh = jnp.dot(hx_mm, wh, preferred_element_type=jnp.float32)   # [TB, 2N]
            s1 = jnp.sum(hh, axis=-1, keepdims=True)
            s2 = jnp.sum(hh * hh, axis=-1, keepdims=True)
            mu_h = s1 * inv_kh
            var_h = jnp.maximum(s2 * inv_kh - mu_h * mu_h, 0.0)
            hhn = (hh - mu_h) * jax.lax.rsqrt(var_h + EPS) * lnh_w
            if apply_lnh_b:
                hhn = hhn + lnh_b

            # chunk(2, dim=1)
            h_i = hhn[:, :N]
            h_g = hhn[:, N:]

            # activation (relu, matching nn.ReLU)
            xa = jnp.maximum(x + h_i, 0.0)                                # [TB, N]

            # ---- x2h: Linear(N -> N, bias=False) + LayerNorm(N) ----
            xx = jnp.dot(xa.astype(matmul_dtype), wx,
                         preferred_element_type=jnp.float32)              # [TB, N]
            s1x = jnp.sum(xx, axis=-1, keepdims=True)
            s2x = jnp.sum(xx * xx, axis=-1, keepdims=True)
            mu_x = s1x * inv_kx
            var_x = jnp.maximum(s2x * inv_kx - mu_x * mu_x, 0.0)
            xxn = (xx - mu_x) * jax.lax.rsqrt(var_x + EPS) * lnx_w + lnx_b

            # gated update: (1-g)*hx + g*xa  ==  hx + g*(xa - hx)
            g = jax.nn.sigmoid(xxn + h_g)
            h_new = hx + g * (xa - hx)

            out_ref[tt] = h_new.astype(out_ref.dtype)
            # Cast for the next step's matmul here (off the next step's
            # critical path).
            return (h_new, h_new.astype(matmul_dtype))

        h_final, _ = lax.fori_loop(0, Tt, step, carry0, unroll=True)
        h_scr[...] = h_final          # carry state to the next time-block

    return kernel


# ----------------------------------------------------------------------------- wrappers
def _default_tile_b(B):
    """Pick a batch tile: >=2 tiles when B>=16 (feeds both v7x TCs), capped at 256
    rows so the hh intermediate stays within vreg budget at typical N."""
    if B < 16:
        return B
    for cand in (256, 128, 64, 32, 16, 8):
        if cand <= B // 2 and B % cand == 0:
            return cand
    return B


def integrator_pallas_scan(x_seq, hx0, params, *, tile_b=None, tile_t=None,
                           matmul_dtype=jnp.bfloat16, io_dtype=jnp.float32):
    """Run the Integrator cell over a [T, B, N] input sequence in one pallas_call.

    Returns h_seq [T, B, N] with h_seq[t] = Integrator.forward(x_seq[t], h_{t-1}),
    where h_{-1} = hx0.  The T-step recurrence is executed inside the kernel
    (time-blocked, fully unrolled), so the grid is only (B//tile_b, T//tile_t).
    """
    T, B, N = x_seq.shape
    if tile_b is None:
        tile_b = _default_tile_b(B)
    assert B % tile_b == 0, "B must be divisible by tile_b"
    assert tile_b == B or tile_b % 8 == 0, "tile_b must be a multiple of 8 (or == B)"
    nb = B // tile_b
    if tile_t is None:
        tile_t = T
    assert T % tile_t == 0, "T must be divisible by tile_t"
    nt = T // tile_t

    lnh_b = params.get("lnh_b", None)            # zero by construction -> dropped
    apply_lnh_b = lnh_b is not None

    wh = params["wh_t"].astype(matmul_dtype)     # [N, 2N]
    wx = params["wx_t"].astype(matmul_dtype)     # [N, N]
    lnh_w = params["lnh_w"].astype(jnp.float32)  # [1, 2N]
    lnx_w = params["lnx_w"].astype(jnp.float32)  # [1, N]
    lnx_b = params["lnx_b"].astype(jnp.float32)  # [1, N]

    x_seq = x_seq.astype(io_dtype)               # streamed I/O precision
    hx0 = hx0.astype(jnp.float32)                # state always carried in f32

    def const_spec(arr):
        # Same block index for every grid step -> DMA'd once; single-buffered
        # (Buffered(1)) since it never changes, halving weight VMEM.
        return pl.BlockSpec(arr.shape, lambda b, t: (0,) * arr.ndim,
                            pipeline_mode=pl.Buffered(1))

    in_arrays = [x_seq, hx0, wh, lnh_w]
    in_specs = [
        pl.BlockSpec((tile_t, tile_b, N), lambda b, t: (t, b, 0)),  # x: time-block tile
        pl.BlockSpec((tile_b, N), lambda b, t: (b, 0)),             # hx0: per-batch tile
        const_spec(wh),
        const_spec(lnh_w),
    ]
    if apply_lnh_b:
        lnh_b = lnh_b.astype(jnp.float32)
        in_arrays.append(lnh_b)
        in_specs.append(const_spec(lnh_b))
    in_arrays += [wx, lnx_w, lnx_b]
    in_specs += [const_spec(wx), const_spec(lnx_w), const_spec(lnx_b)]

    out_spec = pl.BlockSpec((tile_t, tile_b, N), lambda b, t: (t, b, 0))

    # VMEM residency estimate: weights single-buffered, x/out blocks
    # double-buffered by the pipeline, plus the carried-state scratch.
    w_bytes = jnp.dtype(matmul_dtype).itemsize
    io_bytes = jnp.dtype(io_dtype).itemsize
    est = ((N * 2 * N + N * N) * w_bytes
           + (4 * N + (2 * N if apply_lnh_b else 0)) * 4
           + 2 * tile_t * tile_b * N * io_bytes      # x block
           + 2 * tile_b * N * 4                      # hx0 block
           + 2 * tile_t * tile_b * N * io_bytes      # out block
           + tile_b * N * 4)                         # carried-state scratch
    try:
        vmem_cap = int(pltpu.get_tpu_info().vmem_capacity_bytes)
    except Exception:
        vmem_cap = 64 << 20                          # conservative (v7x per-TC)
    vmem_limit = (min(int(est * 1.5) + (4 << 20), int(vmem_cap * 0.9))
                  if est > (12 << 20) else None)

    grid_spec = pltpu.PrefetchScalarGridSpec(
        num_scalar_prefetch=0,
        grid=(nb, nt),
        in_specs=in_specs,
        out_specs=out_spec,
        scratch_shapes=[pltpu.VMEM((tile_b, N), jnp.float32)],
    )

    return pl.pallas_call(
        _make_kernel(apply_lnh_b, matmul_dtype),
        grid_spec=grid_spec,
        out_shape=jax.ShapeDtypeStruct((T, B, N), io_dtype),
        compiler_params=pltpu.CompilerParams(
            dimension_semantics=("parallel", "arbitrary"),
            vmem_limit_bytes=vmem_limit,
        ),
    )(*in_arrays)


def integrator_pallas(x, hx, params, **kw):
    """Single forward step, matching Integrator.forward(x, hx)."""
    return integrator_pallas_scan(x[None], hx, params, **kw)[0]


# ----------------------------------------------------------------------------- params & reference
def make_params(key, out_neurons, Tmax):
    """Deterministic parameter construction mirroring Integrator.__init__/_reset_parameters."""
    N = out_neurons
    k_wx, k_wh, k_bias = jax.random.split(key, 3)

    # nn.Linear default init: U(-1/sqrt(fan_in), 1/sqrt(fan_in)); torch weights are [out, in].
    bound = 1.0 / math.sqrt(N)
    wx = jax.random.uniform(k_wx, (N, N), jnp.float32, -bound, bound)       # x2h Linear
    wh = jax.random.uniform(k_wh, (2 * N, N), jnp.float32, -bound, bound)   # h2h Linear

    # x2h LayerNorm: weight = 0.1, bias = -log(U(1, Tmax-1))
    lnx_w = jnp.full((1, N), 0.1, jnp.float32)
    lnx_b = -jnp.log(jax.random.uniform(k_bias, (1, N), jnp.float32, 1.0, float(Tmax - 1)))

    # h2h LayerNorm: weight = 0.1, bias = 0.  The zero bias is omitted so the kernel
    # skips the add; pass params["lnh_b"] to re-enable a nonzero bias.
    lnh_w = jnp.full((1, 2 * N), 0.1, jnp.float32)

    return {
        "wx_t": wx.T,   # [in, out] = [N, N]
        "wh_t": wh.T,   # [in, out] = [N, 2N]
        "lnx_w": lnx_w, "lnx_b": lnx_b,
        "lnh_w": lnh_w,
    }


def integrator_ref(x, hx, p, matmul_dtype=jnp.float32):
    """Pure-JAX reference of the PyTorch forward (optionally emulating bf16 matmul inputs)."""
    def layernorm(v, w, b):
        mu = jnp.mean(v, axis=-1, keepdims=True)
        var = jnp.mean((v - mu) ** 2, axis=-1, keepdims=True)
        y = (v - mu) / jnp.sqrt(var + EPS) * w
        return y if b is None else y + b

    N = x.shape[-1]
    wh = p["wh_t"].astype(matmul_dtype)
    wx = p["wx_t"].astype(matmul_dtype)
    hh = layernorm(jnp.dot(hx.astype(matmul_dtype), wh, preferred_element_type=jnp.float32),
                   p["lnh_w"], p.get("lnh_b"))
    h_i, h_g = hh[:, :N], hh[:, N:]
    xa = jnp.maximum(x + h_i, 0.0)
    _g = layernorm(jnp.dot(xa.astype(matmul_dtype), wx, preferred_element_type=jnp.float32),
                   p["lnx_w"], p["lnx_b"]) + h_g
    g = jax.nn.sigmoid(_g)
    return (1.0 - g) * hx + g * xa


def integrator_ref_scan(x_seq, hx0, p, matmul_dtype=jnp.float32):
    h = hx0
    outs = []
    for t in range(x_seq.shape[0]):
        h = integrator_ref(x_seq[t], h, p, matmul_dtype)
        outs.append(h)
    return jnp.stack(outs, axis=0)


# ----------------------------------------------------------------------------- main
if __name__ == "__main__":
    key = jax.random.PRNGKey(0)
    k_p, k_x, k_h, k_x2, k_h2 = jax.random.split(key, 5)

    B, N, Tmax = 8, 128, 25
    T = Tmax
    params = make_params(k_p, N, Tmax)
    x_seq = jax.random.normal(k_x, (T, B, N), jnp.float32)
    hx0 = jax.random.normal(k_h, (B, N), jnp.float32)

    # 1) Exact f32 semantics: single step (== Integrator.forward) and fused 25-step scan.
    h1 = jax.block_until_ready(
        integrator_pallas(x_seq[0], hx0, params, matmul_dtype=jnp.float32))
    h1_ref = integrator_ref(x_seq[0], hx0, params)
    assert h1.shape == (B, N) and h1.dtype == jnp.float32
    assert jnp.allclose(h1, h1_ref, atol=1e-5, rtol=1e-5), "single-step f32 mismatch"

    hseq_f32 = jax.block_until_ready(
        integrator_pallas_scan(x_seq, hx0, params, matmul_dtype=jnp.float32))
    hseq_ref = integrator_ref_scan(x_seq, hx0, params)
    assert hseq_f32.shape == (T, B, N)
    assert jnp.allclose(hseq_f32, hseq_ref, atol=2e-4, rtol=2e-4), "fused-scan f32 mismatch"

    # 2) Default mixed-precision path (bf16 matmul operands, f32 state/LN/sigmoid/blend),
    #    checked against a reference emulating the same mixed precision, plus a
    #    sanity bound against exact f32 semantics.
    hseq_bf16 = jax.block_until_ready(integrator_pallas_scan(x_seq, hx0, params))
    hseq_bf16_ref = integrator_ref_scan(x_seq, hx0, params, matmul_dtype=jnp.bfloat16)
    assert jnp.allclose(hseq_bf16, hseq_bf16_ref, atol=5e-3, rtol=5e-3), "fused-scan bf16 mismatch"
    assert float(jnp.max(jnp.abs(hseq_bf16 - hseq_ref))) < 0.1, "bf16 drift vs f32 too large"

    # 3) Multi-batch-tile path (B=32 -> tile_b=16, nb=2: exercises the "parallel"
    #    batch axis that shards across v7x TensorCores), exact f32 semantics.
    B2 = 32
    x_seq2 = jax.random.normal(k_x2, (T, B2, N), jnp.float32)
    hx02 = jax.random.normal(k_h2, (B2, N), jnp.float32)
    hseq2 = jax.block_until_ready(
        integrator_pallas_scan(x_seq2, hx02, params, matmul_dtype=jnp.float32))
    hseq2_ref = integrator_ref_scan(x_seq2, hx02, params)
    assert jnp.allclose(hseq2, hseq2_ref, atol=2e-4, rtol=2e-4), "multi-tile f32 mismatch"

    # 4) bf16 I/O streaming option (halves HBM traffic, useful on v5e): loose sanity bound.
    hseq_io16 = jax.block_until_ready(
        integrator_pallas_scan(x_seq, hx0, params, io_dtype=jnp.bfloat16))
    assert hseq_io16.dtype == jnp.bfloat16
    assert float(jnp.max(jnp.abs(hseq_io16.astype(jnp.float32) - hseq_ref))) < 0.2, \
        "bf16-I/O drift vs f32 too large"

    print("KERNEL_OK")
</pallas_src>

<mosaic_0001>
module attributes {stable_mosaic.version = 11 : i64} {
  func.func @kernel(%arg0: i32, %arg1: i32, %arg2: memref<1x8x128xf32, #tpu.memory_space<vmem>>, %arg3: memref<8x128xf32, #tpu.memory_space<vmem>>, %arg4: memref<128x256xf32, #tpu.memory_space<vmem>>, %arg5: memref<1x256xf32, #tpu.memory_space<vmem>>, %arg6: memref<128x128xf32, #tpu.memory_space<vmem>>, %arg7: memref<1x128xf32, #tpu.memory_space<vmem>>, %arg8: memref<1x128xf32, #tpu.memory_space<vmem>>, %arg9: memref<1x8x128xf32, #tpu.memory_space<vmem>>, %arg10: memref<8x128xf32, #tpu.memory_space<vmem>>) attributes {dimension_semantics = [#tpu.dimension_semantics<parallel>, #tpu.dimension_semantics<arbitrary>], iteration_bounds = array<i64: 1, 1>, scalar_prefetch = 0 : i64, scratch_operands = 1 : i64, tpu.core_type = #tpu.core_type<tc>, window_params = [{transform_indices = @transform_0, window_bounds = array<i64: 1, 8, 128>}, {transform_indices = @transform_1, window_bounds = array<i64: 8, 128>}, {pipeline_mode = #tpu.pipeline_mode<synchronous>, transform_indices = @transform_2, window_bounds = array<i64: 128, 256>}, {pipeline_mode = #tpu.pipeline_mode<synchronous>, transform_indices = @transform_3, window_bounds = array<i64: 1, 256>}, {pipeline_mode = #tpu.pipeline_mode<synchronous>, transform_indices = @transform_4, window_bounds = array<i64: 128, 128>}, {pipeline_mode = #tpu.pipeline_mode<synchronous>, transform_indices = @transform_5, window_bounds = array<i64: 1, 128>}, {pipeline_mode = #tpu.pipeline_mode<synchronous>, transform_indices = @transform_6, window_bounds = array<i64: 1, 128>}, {transform_indices = @transform_7, window_bounds = array<i64: 1, 8, 128>}]} {
    %c0 = arith.constant 0 : index
    %c0_0 = arith.constant 0 : index
    %0 = vector.load %arg4[%c0, %c0_0] : memref<128x256xf32, #tpu.memory_space<vmem>>, vector<128x256xf32>
    %c0_1 = arith.constant 0 : index
    %c0_2 = arith.constant 0 : index
    %1 = vector.load %arg6[%c0_1, %c0_2] : memref<128x128xf32, #tpu.memory_space<vmem>>, vector<128x128xf32>
    %c0_3 = arith.constant 0 : index
    %c0_4 = arith.constant 0 : index
    %2 = vector.load %arg5[%c0_3, %c0_4] : memref<1x256xf32, #tpu.memory_space<vmem>>, vector<1x256xf32>
    %c0_5 = arith.constant 0 : index
    %c0_6 = arith.constant 0 : index
    %3 = vector.load %arg7[%c0_5, %c0_6] : memref<1x128xf32, #tpu.memory_space<vmem>>, vector<1x128xf32>
    %c0_7 = arith.constant 0 : index
    %c0_8 = arith.constant 0 : index
    %4 = vector.load %arg8[%c0_7, %c0_8] : memref<1x128xf32, #tpu.memory_space<vmem>>, vector<1x128xf32>
    %c0_i32 = arith.constant 0 : i32
    %5 = arith.cmpi eq, %arg1, %c0_i32 : i32
    %6 = arith.extui %5 : i1 to i32
    %c0_i32_9 = arith.constant 0 : i32
    %7 = arith.cmpi ne, %6, %c0_i32_9 : i32
    scf.if %7 {
      %c0_34 = arith.constant 0 : index
      %c0_35 = arith.constant 0 : index
      %79 = vector.load %arg3[%c0_34, %c0_35] : memref<8x128xf32, #tpu.memory_space<vmem>>, vector<8x128xf32>
      %c0_36 = arith.constant 0 : index
      %c0_37 = arith.constant 0 : index
      %80 = vector.load %arg10[%c0_36, %c0_37] : memref<8x128xf32, #tpu.memory_space<vmem>>, vector<8x128xf32>
      tpu.vector_store %arg10[%c0_36, %c0_37], %79 {strides = array<i32>} : memref<8x128xf32, #tpu.memory_space<vmem>>, vector<8x128xf32>,
    } else {
    }
    %c0_10 = arith.constant 0 : index
    %c0_11 = arith.constant 0 : index
    %8 = vector.load %arg10[%c0_10, %c0_11] : memref<8x128xf32, #tpu.memory_space<vmem>>, vector<8x128xf32>
    %c0_i32_12 = arith.constant 0 : i32
    %9 = arith.index_cast %c0_i32_12 : i32 to index
    %c0_13 = arith.constant 0 : index
    %c0_14 = arith.constant 0 : index
    %10 = vector.load %arg2[%9, %c0_13, %c0_14] : memref<1x8x128xf32, #tpu.memory_space<vmem>>, vector<1x8x128xf32>
    %11 = vector.shape_cast %10 : vector<1x8x128xf32> to vector<8x128xf32>
    %cst = arith.constant dense<0.000000e+00> : vector<8x256xf32>
    %12 = tpu.matmul %8, %0, %cst {dimension_numbers = #tpu.dot_dimension_numbers<[1], [0], [0], [1], [0, 0, 1, 1], [], []>} : vector<8x128xf32>, vector<128x256xf32>, vector<8x256xf32> -> vector<8x256xf32>
    %cst_15 = arith.constant dense<0.000000e+00> : vector<8xf32>
    %13 = vector.multi_reduction <add>, %12, %cst_15 [1] : vector<8x256xf32> to vector<8xf32>
    %14 = vector.shape_cast %13 : vector<8xf32> to vector<8x1xf32>
    %15 = arith.mulf %12, %12 : vector<8x256xf32>
    %cst_16 = arith.constant dense<0.000000e+00> : vector<8xf32>
    %16 = vector.multi_reduction <add>, %15, %cst_16 [1] : vector<8x256xf32> to vector<8xf32>
    %17 = vector.shape_cast %16 : vector<8xf32> to vector<8x1xf32>
    %cst_17 = arith.constant 3.906250e-03 : f32
    %18 = vector.broadcast %cst_17 : f32 to vector<8x1xf32>
    %19 = arith.mulf %14, %18 : vector<8x1xf32>
    %cst_18 = arith.constant 3.906250e-03 : f32
    %20 = vector.broadcast %cst_18 : f32 to vector<8x1xf32>
    %21 = arith.mulf %17, %20 : vector<8x1xf32>
    %22 = arith.mulf %19, %19 : vector<8x1xf32>
    %23 = arith.subf %21, %22 : vector<8x1xf32>
    %cst_19 = arith.constant 0.000000e+00 : f32
    %24 = vector.broadcast %cst_19 : f32 to vector<8x1xf32>
    %25 = arith.maximumf %23, %24 : vector<8x1xf32>
    %26 = vector.broadcast %19 : vector<8x1xf32> to vector<8x256xf32>
    %27 = arith.subf %12, %26 : vector<8x256xf32>
    %cst_20 = arith.constant 9.99999974E-6 : f32
    %28 = vector.broadcast %cst_20 : f32 to vector<8x1xf32>
    %29 = arith.addf %25, %28 : vector<8x1xf32>
    %30 = math.rsqrt %29 : vector<8x1xf32>
    %31 = vector.broadcast %30 : vector<8x1xf32> to vector<8x256xf32>
    %32 = arith.mulf %27, %31 : vector<8x256xf32>
    %33 = vector.broadcast %2 : vector<1x256xf32> to vector<8x256xf32>
    %34 = arith.mulf %32, %33 : vector<8x256xf32>
    %35 = vector.extract_strided_slice %34 {offsets = [0, 0], sizes = [8, 128], strides = [1, 1]} : vector<8x256xf32> to vector<8x128xf32>
    %36 = vector.extract_strided_slice %34 {offsets = [0, 128], sizes = [8, 128], strides = [1, 1]} : vector<8x256xf32> to vector<8x128xf32>
    %37 = arith.addf %11, %35 : vector<8x128xf32>
    %cst_21 = arith.constant 0.000000e+00 : f32
    %38 = vector.broadcast %cst_21 : f32 to vector<8x128xf32>
    %39 = arith.maximumf %37, %38 : vector<8x128xf32>
    %cst_22 = arith.constant dense<0.000000e+00> : vector<8x128xf32>
    %40 = tpu.matmul %39, %1, %cst_22 {dimension_numbers = #tpu.dot_dimension_numbers<[1], [0], [0], [1], [0, 0, 1, 1], [], []>} : vector<8x128xf32>, vector<128x128xf32>, vector<8x128xf32> -> vector<8x128xf32>
    %cst_23 = arith.constant dense<0.000000e+00> : vector<8xf32>
    %41 = vector.multi_reduction <add>, %40, %cst_23 [1] : vector<8x128xf32> to vector<8xf32>
    %42 = vector.shape_cast %41 : vector<8xf32> to vector<8x1xf32>
    %43 = arith.mulf %40, %40 : vector<8x128xf32>
    %cst_24 = arith.constant dense<0.000000e+00> : vector<8xf32>
    %44 = vector.multi_reduction <add>, %43, %cst_24 [1] : vector<8x128xf32> to vector<8xf32>
    %45 = vector.shape_cast %44 : vector<8xf32> to vector<8x1xf32>
    %cst_25 = arith.constant 7.812500e-03 : f32
    %46 = vector.broadcast %cst_25 : f32 to vector<8x1xf32>
    %47 = arith.mulf %42, %46 : vector<8x1xf32>
    %cst_26 = arith.constant 7.812500e-03 : f32
    %48 = vector.broadcast %cst_26 : f32 to vector<8x1xf32>
    %49 = arith.mulf %45, %48 : vector<8x1xf32>
    %50 = arith.mulf %47, %47 : vector<8x1xf32>
    %51 = arith.subf %49, %50 : vector<8x1xf32>
    %cst_27 = arith.constant 0.000000e+00 : f32
    %52 = vector.broadcast %cst_27 : f32 to vector<8x1xf32>
    %53 = arith.maximumf %51, %52 : vector<8x1xf32>
    %54 = vector.broadcast %47 : vector<8x1xf32> to vector<8x128xf32>
    %55 = arith.subf %40, %54 : vector<8x128xf32>
    %cst_28 = arith.constant 9.99999974E-6 : f32
    %56 = vector.broadcast %cst_28 : f32 to vector<8x1xf32>
    %57 = arith.addf %53, %56 : vector<8x1xf32>
    %58 = math.rsqrt %57 : vector<8x1xf32>
    %59 = vector.broadcast %58 : vector<8x1xf32> to vector<8x128xf32>
    %60 = arith.mulf %55, %59 : vector<8x128xf32>
    %61 = vector.broadcast %3 : vector<1x128xf32> to vector<8x128xf32>
    %62 = arith.mulf %60, %61 : vector<8x128xf32>
    %63 = vector.broadcast %4 : vector<1x128xf32> to vector<8x128xf32>
    %64 = arith.addf %62, %63 : vector<8x128xf32>
    %65 = arith.addf %64, %36 : vector<8x128xf32>
    %66 = arith.negf %65 : vector<8x128xf32>
    %67 = math.exp %66 : vector<8x128xf32>
    %cst_29 = arith.constant 1.000000e+00 : f32
    %68 = vector.broadcast %cst_29 : f32 to vector<8x128xf32>
    %69 = arith.addf %68, %67 : vector<8x128xf32>
    %70 = arith.divf %68, %69 : vector<8x128xf32>
    %71 = arith.subf %39, %8 : vector<8x128xf32>
    %72 = arith.mulf %70, %71 : vector<8x128xf32>
    %73 = arith.addf %8, %72 : vector<8x128xf32>
    %74 = arith.index_cast %c0_i32_12 : i32 to index
    %c0_30 = arith.constant 0 : index
    %c0_31 = arith.constant 0 : index
    %75 = vector.load %arg9[%74, %c0_30, %c0_31] : memref<1x8x128xf32, #tpu.memory_space<vmem>>, vector<1x8x128xf32>
    %76 = vector.shape_cast %75 : vector<1x8x128xf32> to vector<8x128xf32>
    %77 = vector.shape_cast %73 : vector<8x128xf32> to vector<1x8x128xf32>
    tpu.vector_store %arg9[%74, %c0_30, %c0_31], %77 {strides = array<i32>} : memref<1x8x128xf32, #tpu.memory_space<vmem>>, vector<1x8x128xf32>,
    %c1_i32 = arith.constant 1 : i32
    %c0_32 = arith.constant 0 : index
    %c0_33 = arith.constant 0 : index
    %78 = vector.load %arg10[%c0_32, %c0_33] : memref<8x128xf32, #tpu.memory_space<vmem>>, vector<8x128xf32>
    tpu.vector_store %arg10[%c0_32, %c0_33], %73 {strides = array<i32>} : memref<8x128xf32, #tpu.memory_space<vmem>>, vector<8x128xf32>,
    return
  }
  func.func @transform_0(%arg0: i32, %arg1: i32) -> (i32, i32, i32) {
    %c0_i32 = arith.constant 0 : i32
    %c0_i32_0 = arith.constant 0 : i32
    return %arg1, %arg0, %c0_i32 : i32, i32, i32
  }
  func.func @transform_1(%arg0: i32, %arg1: i32) -> (i32, i32) {
    %c0_i32 = arith.constant 0 : i32
    %c0_i32_0 = arith.constant 0 : i32
    return %arg0, %c0_i32 : i32, i32
  }
  func.func @transform_2(%arg0: i32, %arg1: i32) -> (i32, i32) {
    %c0_i32 = arith.constant 0 : i32
    %c0_i32_0 = arith.constant 0 : i32
    %c0_i32_1 = arith.constant 0 : i32
    return %c0_i32, %c0_i32_0 : i32, i32
  }
  func.func @transform_3(%arg0: i32, %arg1: i32) -> (i32, i32) {
    %c0_i32 = arith.constant 0 : i32
    %c0_i32_0 = arith.constant 0 : i32
    %c0_i32_1 = arith.constant 0 : i32
    return %c0_i32, %c0_i32_0 : i32, i32
  }
  func.func @transform_4(%arg0: i32, %arg1: i32) -> (i32, i32) {
    %c0_i32 = arith.constant 0 : i32
    %c0_i32_0 = arith.constant 0 : i32
    %c0_i32_1 = arith.constant 0 : i32
    return %c0_i32, %c0_i32_0 : i32, i32
  }
  func.func @transform_5(%arg0: i32, %arg1: i32) -> (i32, i32) {
    %c0_i32 = arith.constant 0 : i32
    %c0_i32_0 = arith.constant 0 : i32
    %c0_i32_1 = arith.constant 0 : i32
    return %c0_i32, %c0_i32_0 : i32, i32
  }
  func.func @transform_6(%arg0: i32, %arg1: i32) -> (i32, i32) {
    %c0_i32 = arith.constant 0 : i32
    %c0_i32_0 = arith.constant 0 : i32
    %c0_i32_1 = arith.constant 0 : i32
    return %c0_i32, %c0_i32_0 : i32, i32
  }
  func.func @transform_7(%arg0: i32, %arg1: i32) -> (i32, i32, i32) {
    %c0_i32 = arith.constant 0 : i32
    %c0_i32_0 = arith.constant 0 : i32
    return %arg1, %arg0, %c0_i32 : i32, i32, i32
  }
}

</mosaic_0001>

<llo_original>
// kernel: tpu_custom_call.1
$region0: #{tpu_custom_call.1}
  #allocation0 [shape = 'u32[]', space=smem, size = 0x4, offset = 0x4, fixed_abs, tag = 'smem constant byte address 0x4 - core index']
  #allocation1 [shape = 'u32[144,128]{1,0:T(1,128)}', space=vmem, size = 0x12000, scoped, tag = 'internal scratch']
  #allocation2 [shape = 'f32[8,128]{1,0:T(8,128)}', space=vmem, size = 0x1000, scoped, tag = 'scratch operand']
  %s0 = inlined_call_operand.hbm [shape: f32[1,8,128], index: 0, kind: input, shape index: {}]
  %s1 = inlined_call_operand.hbm [shape: f32[8,128], index: 1, kind: input, shape index: {}]
  %s2 = inlined_call_operand.hbm [shape: f32[128,256], index: 2, kind: input, shape index: {}]
  %s3 = inlined_call_operand.vmem [shape: f32[1,256], index: 3, kind: input, shape index: {}]
  %s4 = inlined_call_operand.hbm [shape: f32[128,128], index: 4, kind: input, shape index: {}]
  %s5 = inlined_call_operand.vmem [shape: f32[1,128], index: 5, kind: input, shape index: {}]
  %s6 = inlined_call_operand.vmem [shape: f32[1,128], index: 6, kind: input, shape index: {}]
  %s7 = inlined_call_operand.hbm [shape: f32[1,8,128], index: 7, kind: output, shape index: {}]
  %s8 = sld [smem:[#allocation0]]
  $region58: #{tpu_custom_call.1} parent=0
    _
  %s10 = ssub.s32 1, %s8
  %s11 = scalar_select 0, %s10, %s8
  $region1: #{tpu_custom_call.1} parent=0
    #allocation3 [shape = 'u8[4096]{0}', space=vmem, size = 0x1000, scoped, tag = 'input window, operand 0, single buffered']
    #allocation4 [shape = 's32[1]{0}', space=sflag, size = 0x4, scoped, tag = 'scoped memory for tpu_custom_call.1']
    #allocation5 [shape = 's32[1]{0}', space=sflag, size = 0x4, scoped, tag = 'scoped memory for tpu_custom_call.1']
    #allocation6 [shape = 'u8[4096]{0}', space=vmem, size = 0x1000, scoped, tag = 'input window, operand 1, single buffered']
    #allocation7 [shape = 's32[1]{0}', space=sflag, size = 0x4, scoped, tag = 'scoped memory for tpu_custom_call.1']
    #allocation8 [shape = 'u8[131072]{0}', space=vmem, size = 0x20000, scoped, tag = 'input window, operand 2, single buffered']
    #allocation9 [shape = 'u8[65536]{0}', space=vmem, size = 0x10000, scoped, tag = 'input window, operand 4, single buffered']
    #allocation10 [shape = 's32[1]{0}', space=sflag, size = 0x4, scoped, tag = 'scoped memory for tpu_custom_call.1']
    #allocation11 [shape = 'u8[4096]{0}', space=vmem, size = 0x1000, scoped, tag = 'output window, operand 0, single buffered']
    %12 = vsyncpa [#allocation4], 0
    %13 = vsyncpa [#allocation7], 0
    %14 = vsyncpa [#allocation10], 0
    %15 = vsyncpa [#allocation5], 0
    // Predicated region
    $region2: #{tpu_custom_call.1} parent=1 // pred_check
      _
    $region3: #{tpu_custom_call.1} parent=1 // pred_check_branch
      %17 = sbr.rel (0) target = $region5
    $region4: #{tpu_custom_call.1} parent=1 // pred_region
      %s19 = ssub.s32 128, 128
      %20 = vsyncadd [#allocation4], %s19
      %s22 = sshll.u32 [#allocation3], 4
      %s23 = int_to_ptr.vmem [resolvable:$true] %s22
      %25 = dma.hbm_to_vmem [thread:$0]  %s0, 128, %s23, [#allocation4]
    $region5: #{tpu_custom_call.1} parent=1 // pred_fallthru
      _
    // Predicated region
    $region6: #{tpu_custom_call.1} parent=1 // pred_check
      _
    $region7: #{tpu_custom_call.1} parent=1 // pred_check_branch
      %27 = sbr.rel (0) target = $region9
    $region8: #{tpu_custom_call.1} parent=1 // pred_region
      %s29 = ssub.s32 128, 128
      %30 = vsyncadd [#allocation7], %s29
      %s32 = sshll.u32 [#allocation6], 4
      %s33 = int_to_ptr.vmem [resolvable:$true] %s32
      %35 = dma.hbm_to_vmem [thread:$0]  %s1, 128, %s33, [#allocation7]
    $region9: #{tpu_custom_call.1} parent=1 // pred_fallthru
      _
    // Predicated region
    $region10: #{tpu_custom_call.1} parent=1 // pred_check
      _
    $region11: #{tpu_custom_call.1} parent=1 // pred_check_branch
      %37 = sbr.rel (0) target = $region13
    $region12: #{tpu_custom_call.1} parent=1 // pred_region
      %s39 = ssub.s32 4096, 4096
      %40 = vsyncadd [#allocation7], %s39
      %s41 = sshll.u32 [#allocation8], 4
      %s42 = int_to_ptr.vmem [resolvable:$true] %s41
      %47 = dma.hbm_to_vmem [thread:$0]  %s2, 4096, %s42, [#allocation7], 256, 256, 16
    $region13: #{tpu_custom_call.1} parent=1 // pred_fallthru
      _
    // Predicated region
    $region14: #{tpu_custom_call.1} parent=1 // pred_check
      _
    $region15: #{tpu_custom_call.1} parent=1 // pred_check_branch
      %49 = sbr.rel (0) target = $region17
    $region16: #{tpu_custom_call.1} parent=1 // pred_region
      _
    $region17: #{tpu_custom_call.1} parent=1 // pred_fallthru
      _
    // Predicated region
    $region18: #{tpu_custom_call.1} parent=1 // pred_check
      _
    $region19: #{tpu_custom_call.1} parent=1 // pred_check_branch
      %51 = sbr.rel (0) target = $region21
    $region20: #{tpu_custom_call.1} parent=1 // pred_region
      %s53 = ssub.s32 2048, 2048
      %54 = vsyncadd [#allocation10], %s53
      %s55 = sshll.u32 [#allocation9], 4
      %s56 = int_to_ptr.vmem [resolvable:$true] %s55
      %61 = dma.hbm_to_vmem [thread:$0]  %s4, 2048, %s56, [#allocation10], 128, 128, 8
    $region21: #{tpu_custom_call.1} parent=1 // pred_fallthru
      _
    // Predicated region
    $region22: #{tpu_custom_call.1} parent=1 // pred_check
      _
    $region23: #{tpu_custom_call.1} parent=1 // pred_check_branch
      %63 = sbr.rel (0) target = $region25
    $region24: #{tpu_custom_call.1} parent=1 // pred_region
      _
    $region25: #{tpu_custom_call.1} parent=1 // pred_fallthru
      _
    // Predicated region
    $region26: #{tpu_custom_call.1} parent=1 // pred_check
      _
    $region27: #{tpu_custom_call.1} parent=1 // pred_check_branch
      %65 = sbr.rel (0) target = $region29
    $region28: #{tpu_custom_call.1} parent=1 // pred_region
      _
    $region29: #{tpu_custom_call.1} parent=1 // pred_fallthru
      _
    // Predicated region
    $region30: #{tpu_custom_call.1} parent=1 // pred_check
      _
    $region31: #{tpu_custom_call.1} parent=1 // pred_check_branch
      %67 = sbr.rel (0) target = $region33
    $region32: #{tpu_custom_call.1} parent=1 // pred_region
      %68 = dma.done [#allocation4], 128
    $region33: #{tpu_custom_call.1} parent=1 // pred_fallthru
      _
    // Predicated region
    $region34: #{tpu_custom_call.1} parent=1 // pred_check
      _
    $region35: #{tpu_custom_call.1} parent=1 // pred_check_branch
      %70 = sbr.rel (0) target = $region37
    $region36: #{tpu_custom_call.1} parent=1 // pred_region
      %71 = dma.done [#allocation7], 128
    $region37: #{tpu_custom_call.1} parent=1 // pred_fallthru
      _
    // Predicated region
    $region38: #{tpu_custom_call.1} parent=1 // pred_check
      _
    $region39: #{tpu_custom_call.1} parent=1 // pred_check_branch
      %73 = sbr.rel (0) target = $region41
    $region40: #{tpu_custom_call.1} parent=1 // pred_region
      %74 = dma.done [#allocation7], 4096
    $region41: #{tpu_custom_call.1} parent=1 // pred_fallthru
      _
    // Predicated region
    $region42: #{tpu_custom_call.1} parent=1 // pred_check
      _
    $region43: #{tpu_custom_call.1} parent=1 // pred_check_branch
      %76 = sbr.rel (0) target = $region45
    $region44: #{tpu_custom_call.1} parent=1 // pred_region
      %77 = dma.done [#allocation10], 2048
    $region45: #{tpu_custom_call.1} parent=1 // pred_fallthru
      _
    %v78 = vld [vmem:[#allocation8] sm:$0xff]
    %v79 = vld [vmem:[#allocation8 + $0x8] sm:$0xff]
    %v80 = vld [vmem:[#allocation8 + $0x10] sm:$0xff]
    %v81 = vld [vmem:[#allocation8 + $0x18] sm:$0xff]
    %v82 = vld [vmem:[#allocation8 + $0x20] sm:$0xff]
    %v83 = vld [vmem:[#allocation8 + $0x28] sm:$0xff]
    %v84 = vld [vmem:[#allocation8 + $0x30] sm:$0xff]
    %v85 = vld [vmem:[#allocation8 + $0x38] sm:$0xff]
    %v86 = vld [vmem:[#allocation8 + $0x40] sm:$0xff]
    %v87 = vld [vmem:[#allocation8 + $0x48] sm:$0xff]
    %v88 = vld [vmem:[#allocation8 + $0x50] sm:$0xff]
    %v89 = vld [vmem:[#allocation8 + $0x58] sm:$0xff]
    %v90 = vld [vmem:[#allocation8 + $0x60] sm:$0xff]
    %v91 = vld [vmem:[#allocation8 + $0x68] sm:$0xff]
    %v92 = vld [vmem:[#allocation8 + $0x70] sm:$0xff]
    %v93 = vld [vmem:[#allocation8 + $0x78] sm:$0xff]
    %v94 = vld [vmem:[#allocation8 + $0x80] sm:$0xff]
    %v95 = vld [vmem:[#allocation8 + $0x88] sm:$0xff]
    %v96 = vld [vmem:[#allocation8 + $0x90] sm:$0xff]
    %v97 = vld [vmem:[#allocation8 + $0x98] sm:$0xff]
    %v98 = vld [vmem:[#allocation8 + $0xa0] sm:$0xff]
    %v99 = vld [vmem:[#allocation8 + $0xa8] sm:$0xff]
    %v100 = vld [vmem:[#allocation8 + $0xb0] sm:$0xff]
    %v101 = vld [vmem:[#allocation8 + $0xb8] sm:$0xff]
    %v102 = vld [vmem:[#allocation8 + $0xc0] sm:$0xff]
    %v103 = vld [vmem:[#allocation8 + $0xc8] sm:$0xff]
    %v104 = vld [vmem:[#allocation8 + $0xd0] sm:$0xff]
    %v105 = vld [vmem:[#allocation8 + $0xd8] sm:$0xff]
    %v106 = vld [vmem:[#allocation8 + $0xe0] sm:$0xff]
    %v107 = vld [vmem:[#allocation8 + $0xe8] sm:$0xff]
    %v108 = vld [vmem:[#allocation8 + $0xf0] sm:$0xff]
    %v109 = vld [vmem:[#allocation8 + $0xf8] sm:$0xff]
    %v110 = vld [vmem:[#allocation9] sm:$0xff]
    %v111 = vld [vmem:[#allocation9 + $0x8] sm:$0xff]
    %v112 = vld [vmem:[#allocation9 + $0x10] sm:$0xff]
    %v113 = vld [vmem:[#allocation9 + $0x18] sm:$0xff]
    %v114 = vld [vmem:[#allocation9 + $0x20] sm:$0xff]
    %v115 = vld [vmem:[#allocation9 + $0x28] sm:$0xff]
    %v116 = vld [vmem:[#allocation9 + $0x30] sm:$0xff]
    %v117 = vld [vmem:[#allocation9 + $0x38] sm:$0xff]
    %v118 = vld [vmem:[#allocation9 + $0x40] sm:$0xff]
    %v119 = vld [vmem:[#allocation9 + $0x48] sm:$0xff]
    %v120 = vld [vmem:[#allocation9 + $0x50] sm:$0xff]
    %v121 = vld [vmem:[#allocation9 + $0x58] sm:$0xff]
    %v122 = vld [vmem:[#allocation9 + $0x60] sm:$0xff]
    %v123 = vld [vmem:[#allocation9 + $0x68] sm:$0xff]
    %v124 = vld [vmem:[#allocation9 + $0x70] sm:$0xff]
    %v125 = vld [vmem:[#allocation9 + $0x78] sm:$0xff]
    %v126 = vld [vmem:[%s3] sm:$0x3]
    %v127 = vld [vmem:[%s5] sm:$0x1]
    %v128 = vld [vmem:[%s6] sm:$0x1]
    %p129 = scmp.eq.s32.totalorder 0, 0
    // Predicated region
    $region46: #{tpu_custom_call.1} parent=1 // pred_check
      %p130 = pneg %p129
    $region47: #{tpu_custom_call.1} parent=1 // pred_check_branch
      %132 = sbr.rel (%p130) target = $region49
    $region48: #{tpu_custom_call.1} parent=1 // pred_region
      %v133 = vld [vmem:[#allocation6] sm:$0xff]
      %134 = vst [vmem:[#allocation2] sm:$0xff] %v133
    $region49: #{tpu_custom_call.1} parent=1 // pred_fallthru
      _
    %v135 = vld [vmem:[#allocation2] sm:$0xff]
    %v136 = vld [vmem:[#allocation3] sm:$0xff]
    %137 = vmatprep.subr.mxu0 %v79
    %138 = vmatpush1.msra.mxu0 %v78
    %139 = vmatprep.subr.mxu0 %v81
    %140 = vmatpush1.msra.mxu0 %v80
    %141 = vmatprep.subr.mxu0 %v83
    %142 = vmatpush1.msra.mxu0 %v82
    %143 = vmatprep.subr.mxu0 %v85
    %144 = vmatpush1.msra.mxu0 %v84
    %145 = vmatprep.subr.mxu0 %v87
    %146 = vmatpush1.msra.mxu0 %v86
    %147 = vmatprep.subr.mxu0 %v89
    %148 = vmatpush1.msra.mxu0 %v88
    %149 = vmatprep.subr.mxu0 %v91
    %150 = vmatpush1.msra.mxu0 %v90
    %151 = vmatprep.subr.mxu0 %v93
    %152 = vmatpush1.msra.mxu0 %v92
    %153 = vmatprep.subr.mxu0 %v95
    %154 = vmatpush1.msra.mxu0 %v94
    %155 = vmatprep.subr.mxu0 %v97
    %156 = vmatpush1.msra.mxu0 %v96
    %157 = vmatprep.subr.mxu0 %v99
    %158 = vmatpush1.msra.mxu0 %v98
    %159 = vmatprep.subr.mxu0 %v101
    %160 = vmatpush1.msra.mxu0 %v100
    %161 = vmatprep.subr.mxu0 %v103
    %162 = vmatpush1.msra.mxu0 %v102
    %163 = vmatprep.subr.mxu0 %v105
    %164 = vmatpush1.msra.mxu0 %v104
    %165 = vmatprep.subr.mxu0 %v107
    %166 = vmatpush1.msra.mxu0 %v106
    %167 = vmatprep.subr.mxu0 %v109
    %168 = vmatpush1.msra.mxu0 %v108
    %169 = vmatprep.subr.mxu0 0.0
    %170 = vmatpush1.msra.mxu0 0.0
    %171 = vmatprep.subr.mxu0 0.0
    %172 = vmatpush1.msra.mxu0 0.0
    %173 = vmatprep.subr.mxu0 0.0
    %174 = vmatpush1.msra.mxu0 0.0
    %175 = vmatprep.subr.mxu0 0.0
    %176 = vmatpush1.msra.mxu0 0.0
    %177 = vmatprep.subr.mxu0 0.0
    %178 = vmatpush1.msra.mxu0 0.0
    %179 = vmatprep.subr.mxu0 0.0
    %180 = vmatpush1.msra.mxu0 0.0
    %181 = vmatprep.subr.mxu0 0.0
    %182 = vmatpush1.msra.mxu0 0.0
    %183 = vmatprep.subr.mxu0 0.0
    %184 = vmatpush1.msra.mxu0 0.0
    %185 = vmatprep.subr.mxu0 0.0
    %186 = vmatpush1.msra.mxu0 0.0
    %187 = vmatprep.subr.mxu0 0.0
    %188 = vmatpush1.msra.mxu0 0.0
    %189 = vmatprep.subr.mxu0 0.0
    %190 = vmatpush1.msra.mxu0 0.0
    %191 = vmatprep.subr.mxu0 0.0
    %192 = vmatpush1.msra.mxu0 0.0
    %193 = vmatprep.subr.mxu0 0.0
    %194 = vmatpush1.msra.mxu0 0.0
    %195 = vmatprep.subr.mxu0 0.0
    %196 = vmatpush1.msra.mxu0 0.0
    %197 = vmatprep.subr.mxu0 0.0
    %198 = vmatpush1.msra.mxu0 0.0
    %199 = vmatprep.subr.mxu0 0.0
    %200 = vmatpush1.msra.mxu0 0.0
    %201 = vmatprep.mubr.f32.mxu0 0.0
    %202 = vmatmul.mubr.f32.gmra.mrb[0].mxu0 %v135
    %v203 = vpop.f32.mrb[0].mxu0
    %v204 = vadd.f32 0.0, %v203
    %v205 = vpop.f32.mrb[0].mxu0
    %v206 = vadd.f32 0.0, %v205
    %207 = vdwg.mxu0
    %v208 = vadd.f32 %v204, %v206
    %209 = vadd.xlane.f32.xlu0 %v208
    %v210 = vpop.xlane.xlu0 %209
    %v211 = vmul.f32 %v204, %v204
    %v212 = vmul.f32 %v206, %v206
    %v213 = vadd.f32 %v211, %v212
    %214 = vadd.xlane.f32.xlu0 %v213
    %v215 = vpop.xlane.xlu0 %214
    %v216 = vmul.f32 %v210, 0.00390625
    %v217 = vmul.f32 %v215, 0.00390625
    %v218 = vmul.f32 %v216, %v216
    %v219 = vsub.f32 %v217, %v218
    %v220 = vmax.f32 %v219, 0.0
    %v221 = vsub.f32 %v204, %v216
    %v222 = vsub.f32 %v206, %v216
    %v223 = vadd.f32 %v220, 1e-05
    %v224 = vrsqrt.pop %v223
    %v225 = vmul.f32 %v221, %v224
    %v226 = vmul.f32 %v222, %v224
    %v228 = vlaneseq
    %v229 = vshrl.u32 %v228, 7
    %v230 = vsub.s32 0, %v229
    %v231 = vrot.slane %v126, %v230
    %v232 = vlaneseq
    %v233 = vshrl.u32 %v232, 7
    %v234 = vsub.s32 1, %v233
    %v235 = vrot.slane %v126, %v234
    %v238 = vmul.f32 %v225, %v231
    %v239 = vmul.f32 %v226, %v235
    %v240 = vadd.f32 %v136, %v238
    %v241 = vmax.f32 %v240, 0.0
    %242 = vmatprep.subr.mxu0 0.0
    %243 = vmatpush1.msra.mxu0 %v110
    %244 = vmatprep.subr.mxu0 0.0
    %245 = vmatpush1.msra.mxu0 %v111
    %246 = vmatprep.subr.mxu0 0.0
    %247 = vmatpush1.msra.mxu0 %v112
    %248 = vmatprep.subr.mxu0 0.0
    %249 = vmatpush1.msra.mxu0 %v113
    %250 = vmatprep.subr.mxu0 0.0
    %251 = vmatpush1.msra.mxu0 %v114
    %252 = vmatprep.subr.mxu0 0.0
    %253 = vmatpush1.msra.mxu0 %v115
    %254 = vmatprep.subr.mxu0 0.0
    %255 = vmatpush1.msra.mxu0 %v116
    %256 = vmatprep.subr.mxu0 0.0
    %257 = vmatpush1.msra.mxu0 %v117
    %258 = vmatprep.subr.mxu0 0.0
    %259 = vmatpush1.msra.mxu0 %v118
    %260 = vmatprep.subr.mxu0 0.0
    %261 = vmatpush1.msra.mxu0 %v119
    %262 = vmatprep.subr.mxu0 0.0
    %263 = vmatpush1.msra.mxu0 %v120
    %264 = vmatprep.subr.mxu0 0.0
    %265 = vmatpush1.msra.mxu0 %v121
    %266 = vmatprep.subr.mxu0 0.0
    %267 = vmatpush1.msra.mxu0 %v122
    %268 = vmatprep.subr.mxu0 0.0
    %269 = vmatpush1.msra.mxu0 %v123
    %270 = vmatprep.subr.mxu0 0.0
    %271 = vmatpush1.msra.mxu0 %v124
    %272 = vmatprep.subr.mxu0 0.0
    %273 = vmatpush1.msra.mxu0 %v125
    %274 = vmatprep.subr.mxu0 0.0
    %275 = vmatpush1.msra.mxu0 0.0
    %276 = vmatprep.subr.mxu0 0.0
    %277 = vmatpush1.msra.mxu0 0.0
    %278 = vmatprep.subr.mxu0 0.0
    %279 = vmatpush1.msra.mxu0 0.0
    %280 = vmatprep.subr.mxu0 0.0
    %281 = vmatpush1.msra.mxu0 0.0
    %282 = vmatprep.subr.mxu0 0.0
    %283 = vmatpush1.msra.mxu0 0.0
    %284 = vmatprep.subr.mxu0 0.0
    %285 = vmatpush1.msra.mxu0 0.0
    %286 = vmatprep.subr.mxu0 0.0
    %287 = vmatpush1.msra.mxu0 0.0
    %288 = vmatprep.subr.mxu0 0.0
    %289 = vmatpush1.msra.mxu0 0.0
    %290 = vmatprep.subr.mxu0 0.0
    %291 = vmatpush1.msra.mxu0 0.0
    %292 = vmatprep.subr.mxu0 0.0
    %293 = vmatpush1.msra.mxu0 0.0
    %294 = vmatprep.subr.mxu0 0.0
    %295 = vmatpush1.msra.mxu0 0.0
    %296 = vmatprep.subr.mxu0 0.0
    %297 = vmatpush1.msra.mxu0 0.0
    %298 = vmatprep.subr.mxu0 0.0
    %299 = vmatpush1.msra.mxu0 0.0
    %300 = vmatprep.subr.mxu0 0.0
    %301 = vmatpush1.msra.mxu0 0.0
    %302 = vmatprep.subr.mxu0 0.0
    %303 = vmatpush1.msra.mxu0 0.0
    %304 = vmatprep.subr.mxu0 0.0
    %305 = vmatpush1.msra.mxu0 0.0
    %306 = vmatprep.mubr.f32.mxu0 0.0
    %307 = vmatmul.mubr.f32.gmra.mrb[0].mxu0 %v241
    %v308 = vpop.f32.mrb[0].mxu0
    %v309 = vadd.f32 0.0, %v308
    %v310 = vpop.f32.mrb[0].mxu0
    %311 = vdwg.mxu0
    %312 = vadd.xlane.f32.xlu0 %v309
    %v313 = vpop.xlane.xlu0 %312
    %v314 = vmul.f32 %v309, %v309
    %315 = vadd.xlane.f32.xlu0 %v314
    %v316 = vpop.xlane.xlu0 %315
    %v317 = vmul.f32 %v313, 0.0078125
    %v318 = vmul.f32 %v316, 0.0078125
    %v319 = vmul.f32 %v317, %v317
    %v320 = vsub.f32 %v318, %v319
    %v321 = vmax.f32 %v320, 0.0
    %v322 = vsub.f32 %v309, %v317
    %v323 = vadd.f32 %v321, 1e-05
    %v324 = vrsqrt.pop %v323
    %v325 = vmul.f32 %v322, %v324
    %v327 = vlaneseq
    %v328 = vshrl.u32 %v327, 7
    %v329 = vsub.s32 0, %v328
    %v330 = vrot.slane %v127, %v329
    %v332 = vmul.f32 %v325, %v330
    %v334 = vlaneseq
    %v335 = vshrl.u32 %v334, 7
    %v336 = vsub.s32 0, %v335
    %v337 = vrot.slane %v128, %v336
    %v339 = vadd.f32 %v332, %v337
    %v340 = vadd.f32 %v339, %v239
    %v341 = vxor.u32 %v340, 2147483648
    %v342 = vmul.f32 %v341, 1.442695
    %v343 = vpow.pop %v342
    %v344 = vadd.f32 %v343, 1.0
    %v345 = vrcp.pop %v344
    %v346 = vmul.f32 1.0, %v345
    %v347 = vsub.f32 %v241, %v135
    %v348 = vmul.f32 %v346, %v347
    %v349 = vadd.f32 %v135, %v348
    %350 = vst [vmem:[#allocation11] sm:$0xff] %v349
    %351 = vst [vmem:[#allocation2] sm:$0xff] %v349
    // Predicated region
    $region50: #{tpu_custom_call.1} parent=1 // pred_check
      _
    $region51: #{tpu_custom_call.1} parent=1 // pred_check_branch
      %353 = sbr.rel (0) target = $region53
    $region52: #{tpu_custom_call.1} parent=1 // pred_region
      %s355 = ssub.s32 128, 128
      %356 = vsyncadd [#allocation5], %s355
      %s358 = sshll.u32 [#allocation11], 4
      %s359 = int_to_ptr.vmem [resolvable:$true] %s358
      %361 = dma.vmem_to_hbm [thread:$0]  %s359, 128, %s7, [#allocation5]
    $region53: #{tpu_custom_call.1} parent=1 // pred_fallthru
      _
    // Predicated region
    $region54: #{tpu_custom_call.1} parent=1 // pred_check
      _
    $region55: #{tpu_custom_call.1} parent=1 // pred_check_branch
      %363 = sbr.rel (0) target = $region57
    $region56: #{tpu_custom_call.1} parent=1 // pred_region
      %364 = dma.done [#allocation5], 128
    $region57: #{tpu_custom_call.1} parent=1 // pred_fallthru
      _
    %365 = vsyncpa [#allocation4], 1
    %366 = vsyncpa [#allocation7], 1
    %367 = vsyncpa [#allocation10], 1
    %368 = vsyncpa [#allocation5], 1

</llo_original>
